<compile_context>
chip_gen: v5e
topology: v5e:2x2
jax: 0.10.0
libtpu: 0.0.40
codegen_flags: <defaults>
</compile_context>

<pallas_src>
import functools

import jax
import jax.numpy as jnp
from jax import lax
from jax.experimental import pallas as pl
from jax.experimental.pallas import tpu as pltpu


def _round_up(v, m):
    return ((v + m - 1) // m) * m


def _vmem_limit_bytes():
    """~75% of physical VMEM (96 MiB on 128-MiB parts, 48 MiB on v7x)."""
    try:
        cap = int(pltpu.get_tpu_info().vmem_capacity_bytes)
    except Exception:
        cap = 64 * 1024 * 1024
    return int(min(max(cap * 3 // 4, 32 * 1024 * 1024), 100 * 1024 * 1024))


def _conv_stats_kernel(cols_ref, w_ref, stats_ref):
    """Pass 1: conv tile as one MXU matmul -> per-tile partial BN statistics.

    cols_ref:  (tm, Kp) bf16 im2col tile (zero rows/cols in the padding)
    w_ref:     (Kp, Cp) bf16 weights (zero rows/cols in the padding)
    stats_ref: (2, Cp)  f32 [sum; sum_of_squares] partial for this grid step
    """
    acc = jnp.dot(cols_ref[...], w_ref[...],
                  preferred_element_type=jnp.float32)        # (tm, Cp) f32
    s = jnp.sum(acc, axis=0, keepdims=True)                  # (1, Cp)
    s2 = jnp.sum(acc * acc, axis=0, keepdims=True)           # (1, Cp)
    stats_ref[...] = jnp.concatenate([s, s2], axis=0)


def _conv_bn_relu_kernel(ss_ref, cols_ref, w_ref, out_ref):
    """Pass 2: recompute conv tile, fused BN scale/shift + ReLU, lane-dense store.

    ss_ref:   (2, Cp)  f32 precomputed [scale; shift]
    cols_ref: (tm, Kp) bf16 im2col tile
    w_ref:    (Kp, Cp) bf16 weights
    out_ref:  (tm, Cp) output tile
    """
    acc = jnp.dot(cols_ref[...], w_ref[...],
                  preferred_element_type=jnp.float32)        # (tm, Cp) f32
    y = acc * ss_ref[0:1, :] + ss_ref[1:2, :]                # single FMA pass
    out_ref[...] = jnp.maximum(y, 0.0).astype(out_ref.dtype)


@functools.partial(jax.jit, static_argnames=("padding", "compute_dtype"))
def block_forward(x_nchw, w, b, gamma, beta, *, padding,
                  compute_dtype=jnp.bfloat16):
    """NCHW in/out wrapper around the two fused Pallas passes.

    x_nchw: (N, Cin, H, W); w: (Cout, Cin, k, k) (PyTorch layouts).
    `b` (conv bias) is accepted for API parity but unused: a bias added before
    a train-mode BatchNorm is cancelled exactly by the mean subtraction.
    """
    N, Cin, H, W = x_nchw.shape
    Cout, _, k, _ = w.shape
    Ho = H + 2 * padding - k + 1
    Wo = W + 2 * padding - k + 1
    M = Ho * Wo
    K = k * k * Cin
    Kp = _round_up(K, 128)                  # aligned MXU contraction depth
    Cp = _round_up(Cout, 128)               # lane-dense channel padding
    tm = min(512, _round_up(M, 8))          # M-tile (multiple of 8 sublanes)
    Mp = _round_up(M, tm)
    n_mt = Mp // tm
    del b                                    # cancelled by train-mode BN

    # ---- glue: NCHW -> padded NHWC -> im2col (M, K) -> zero-pad to (Mp, Kp) ----
    # im2col is done in XLA so the kernels see a lane-dense operand even for
    # tiny Cin (Cin=4 would waste 124/128 lanes per vreg in-kernel).
    # TODO(synk): for large Cin (>= ~32) do im2col inside the kernel with a
    # halo-tiled spatial BlockSpec to avoid the k*k HBM blow-up of the cols slab.
    x = jnp.transpose(x_nchw, (0, 2, 3, 1)).astype(compute_dtype)
    x = jnp.pad(x, ((0, 0), (padding, padding), (padding, padding), (0, 0)))
    cols = jnp.concatenate(
        [x[:, di:di + Ho, dj:dj + Wo, :] for di in range(k) for dj in range(k)],
        axis=-1).reshape(N, M, K)
    cols = jnp.pad(cols, ((0, 0), (0, Mp - M), (0, Kp - K)))  # zero rows/cols

    # Weight: (Cout, Cin, k, k) -> (k, k, Cin, Cout) -> (K, Cout) -> (Kp, Cp).
    w2 = jnp.transpose(w, (2, 3, 1, 0)).reshape(K, Cout)
    w2 = jnp.pad(w2, ((0, Kp - K), (0, Cp - Cout))).astype(compute_dtype)

    vmem_lim = _vmem_limit_bytes()

    # ---- pass 1: conv tile + per-tile partial BN statistics (megacore-parallel) ----
    # TODO(synk): for layers with large K (conv not cheap to recompute), add the
    # alternate path that writes a bf16 conv slab here and streams it in pass 2.
    partial_stats = pl.pallas_call(
        _conv_stats_kernel,
        grid=(N, n_mt),
        in_specs=[
            pl.BlockSpec((None, tm, Kp), lambda n, m: (n, m, 0)),
            pl.BlockSpec((Kp, Cp), lambda n, m: (0, 0)),
        ],
        out_specs=pl.BlockSpec((None, None, 2, Cp), lambda n, m: (n, m, 0, 0)),
        out_shape=jax.ShapeDtypeStruct((N, n_mt, 2, Cp), jnp.float32),
        compiler_params=pltpu.CompilerParams(
            dimension_semantics=("parallel", "parallel"),
            vmem_limit_bytes=vmem_lim),
    )(cols, w2)

    # Tiny XLA reduction of the partials + BN scale/shift precompute
    # (hoisted out of the per-tile pass-2 body).  Zero-padded M rows / K cols
    # contribute exactly zero, so dividing by the real count is correct.
    stats = jnp.sum(partial_stats, axis=(0, 1))              # (2, Cp) f32
    count = float(N * M)
    mean = stats[0] / count
    var = jnp.maximum(stats[1] / count - mean * mean, 0.0)
    inv_std = lax.rsqrt(var + 1e-5)
    scale = jnp.pad(gamma, (0, Cp - Cout)).astype(jnp.float32) * inv_std
    shift = jnp.pad(beta, (0, Cp - Cout)).astype(jnp.float32) - mean * scale
    scale_shift = jnp.stack([scale, shift])                  # (2, Cp) f32

    # ---- pass 2: recompute conv tile, fused scale/shift + ReLU, store ----
    out_slab = pl.pallas_call(
        _conv_bn_relu_kernel,
        grid=(N, n_mt),
        in_specs=[
            pl.BlockSpec((2, Cp), lambda n, m: (0, 0)),
            pl.BlockSpec((None, tm, Kp), lambda n, m: (n, m, 0)),
            pl.BlockSpec((Kp, Cp), lambda n, m: (0, 0)),
        ],
        out_specs=pl.BlockSpec((None, tm, Cp), lambda n, m: (n, m, 0)),
        out_shape=jax.ShapeDtypeStruct((N, Mp, Cp), x_nchw.dtype),
        compiler_params=pltpu.CompilerParams(
            dimension_semantics=("parallel", "parallel"),
            vmem_limit_bytes=vmem_lim),
    )(scale_shift, cols, w2)

    # Glue back: drop M/channel padding, restore NCHW.
    # TODO(synk): for Cout < 128, pack several images along the lane axis per
    # grid step to cut the padded-channel write amplification of this store.
    out = out_slab[:, :M, :Cout].reshape(N, Ho, Wo, Cout)
    return jnp.transpose(out, (0, 3, 1, 2))


def _reference(x_nchw, w, b, gamma, beta, padding, conv_dtype=jnp.float32):
    """Pure-JAX reference reproducing the PyTorch forward (train-mode BN)."""
    conv = lax.conv_general_dilated(
        x_nchw.astype(conv_dtype), w.astype(conv_dtype),
        window_strides=(1, 1),
        padding=((padding, padding), (padding, padding)),
        dimension_numbers=("NCHW", "OIHW", "NCHW"),
        preferred_element_type=jnp.float32)
    conv = conv + b.reshape(1, -1, 1, 1)
    mean = jnp.mean(conv, axis=(0, 2, 3), keepdims=True)
    var = jnp.mean((conv - mean) ** 2, axis=(0, 2, 3), keepdims=True)
    y = (conv - mean) * lax.rsqrt(var + 1e-5)
    y = y * gamma.reshape(1, -1, 1, 1) + beta.reshape(1, -1, 1, 1)
    return jnp.maximum(y, 0.0)


if __name__ == "__main__":
    # Block(in_channels=4, out_channels=8, kernel=3, padding=1) at small shapes.
    N, Cin, H, W = 2, 4, 16, 16
    Cout, k, padding = 8, 3, 1

    key = jax.random.PRNGKey(0)
    kx, kw, kb = jax.random.split(key, 3)

    x = jax.random.normal(kx, (N, Cin, H, W), dtype=jnp.float32)

    # Deterministic parameter init (synthetic; PyTorch shapes).
    fan_in = Cin * k * k
    bound = 1.0 / (fan_in ** 0.5)
    w = jax.random.uniform(kw, (Cout, Cin, k, k), jnp.float32, -bound, bound)
    b = jax.random.uniform(kb, (Cout,), jnp.float32, -bound, bound)
    gamma = jnp.ones((Cout,), jnp.float32)   # BatchNorm2d weight init
    beta = jnp.zeros((Cout,), jnp.float32)   # BatchNorm2d bias init

    out = jax.block_until_ready(block_forward(x, w, b, gamma, beta, padding=padding))
    assert out.shape == (N, Cout, H, W), out.shape

    # Tight check vs. a reference using the same bf16-operand / f32-accum conv.
    ref_bf16 = jax.block_until_ready(
        _reference(x, w, b, gamma, beta, padding, conv_dtype=jnp.bfloat16))
    err_bf16 = float(jnp.max(jnp.abs(out - ref_bf16)))
    assert jnp.allclose(out, ref_bf16, atol=2e-3, rtol=2e-3), err_bf16

    # Sanity check vs. the full-f32 PyTorch-style reference (bf16 rounding slack).
    ref_f32 = jax.block_until_ready(_reference(x, w, b, gamma, beta, padding))
    err_f32 = float(jnp.max(jnp.abs(out - ref_f32)))
    assert jnp.allclose(out, ref_f32, atol=5e-2, rtol=5e-2), err_f32

    print("KERNEL_OK")
</pallas_src>

<mosaic_0001>
module attributes {stable_mosaic.version = 11 : i64} {
  func.func @_conv_stats_kernel(%arg0: i32, %arg1: i32, %arg2: memref<1x256x128xbf16, #tpu.memory_space<vmem>>, %arg3: memref<128x128xbf16, #tpu.memory_space<vmem>>, %arg4: memref<1x1x2x128xf32, #tpu.memory_space<vmem>>) attributes {dimension_semantics = [#tpu.dimension_semantics<parallel>, #tpu.dimension_semantics<parallel>], iteration_bounds = array<i64: 2, 1>, scalar_prefetch = 0 : i64, scratch_operands = 0 : i64, tpu.core_type = #tpu.core_type<tc>, window_params = [{transform_indices = @transform_0, window_bounds = array<i64: 1, 256, 128>}, {pipeline_mode = #tpu.pipeline_mode<synchronous>, transform_indices = @transform_1, window_bounds = array<i64: 128, 128>}, {transform_indices = @transform_2, window_bounds = array<i64: 1, 1, 2, 128>}]} {
    %c0 = arith.constant 0 : index
    %c0_0 = arith.constant 0 : index
    %c0_1 = arith.constant 0 : index
    %0 = vector.load %arg2[%c0, %c0_0, %c0_1] : memref<1x256x128xbf16, #tpu.memory_space<vmem>>, vector<1x256x128xbf16>
    %1 = vector.shape_cast %0 : vector<1x256x128xbf16> to vector<256x128xbf16>
    %c0_2 = arith.constant 0 : index
    %c0_3 = arith.constant 0 : index
    %2 = vector.load %arg3[%c0_2, %c0_3] : memref<128x128xbf16, #tpu.memory_space<vmem>>, vector<128x128xbf16>
    %cst = arith.constant dense<0.000000e+00> : vector<256x128xf32>
    %3 = tpu.matmul %1, %2, %cst {dimension_numbers = #tpu.dot_dimension_numbers<[1], [0], [0], [1], [0, 0, 1, 1], [], []>} : vector<256x128xbf16>, vector<128x128xbf16>, vector<256x128xf32> -> vector<256x128xf32>
    %cst_4 = arith.constant dense<0.000000e+00> : vector<128xf32>
    %4 = vector.multi_reduction <add>, %3, %cst_4 [0] : vector<256x128xf32> to vector<128xf32>
    %5 = vector.shape_cast %4 : vector<128xf32> to vector<1x128xf32>
    %6 = arith.mulf %3, %3 : vector<256x128xf32>
    %cst_5 = arith.constant dense<0.000000e+00> : vector<128xf32>
    %7 = vector.multi_reduction <add>, %6, %cst_5 [0] : vector<256x128xf32> to vector<128xf32>
    %8 = vector.shape_cast %7 : vector<128xf32> to vector<1x128xf32>
    %9 = tpu.concatenate %5, %8 in 0 : vector<1x128xf32>, vector<1x128xf32> -> vector<2x128xf32>
    %c0_6 = arith.constant 0 : index
    %c0_7 = arith.constant 0 : index
    %c0_8 = arith.constant 0 : index
    %c0_9 = arith.constant 0 : index
    %10 = vector.load %arg4[%c0_6, %c0_7, %c0_8, %c0_9] : memref<1x1x2x128xf32, #tpu.memory_space<vmem>>, vector<1x1x2x128xf32>
    %11 = vector.shape_cast %10 : vector<1x1x2x128xf32> to vector<2x128xf32>
    %12 = vector.shape_cast %9 : vector<2x128xf32> to vector<1x1x2x128xf32>
    tpu.vector_store %arg4[%c0_6, %c0_7, %c0_8, %c0_9], %12 {strides = array<i32>} : memref<1x1x2x128xf32, #tpu.memory_space<vmem>>, vector<1x1x2x128xf32>,
    return
  }
  func.func @transform_0(%arg0: i32, %arg1: i32) -> (i32, i32, i32) {
    %c0_i32 = arith.constant 0 : i32
    %c0_i32_0 = arith.constant 0 : i32
    return %arg0, %arg1, %c0_i32 : i32, i32, i32
  }
  func.func @transform_1(%arg0: i32, %arg1: i32) -> (i32, i32) {
    %c0_i32 = arith.constant 0 : i32
    %c0_i32_0 = arith.constant 0 : i32
    %c0_i32_1 = arith.constant 0 : i32
    return %c0_i32, %c0_i32_0 : i32, i32
  }
  func.func @transform_2(%arg0: i32, %arg1: i32) -> (i32, i32, i32, i32) {
    %c0_i32 = arith.constant 0 : i32
    %c0_i32_0 = arith.constant 0 : i32
    %c0_i32_1 = arith.constant 0 : i32
    return %arg0, %arg1, %c0_i32, %c0_i32_0 : i32, i32, i32, i32
  }
}

module attributes {stable_mosaic.version = 11 : i64} {
  func.func @_conv_bn_relu_kernel(%arg0: i32, %arg1: i32, %arg2: memref<2x128xf32, #tpu.memory_space<vmem>>, %arg3: memref<1x256x128xbf16, #tpu.memory_space<vmem>>, %arg4: memref<128x128xbf16, #tpu.memory_space<vmem>>, %arg5: memref<1x256x128xf32, #tpu.memory_space<vmem>>) attributes {dimension_semantics = [#tpu.dimension_semantics<parallel>, #tpu.dimension_semantics<parallel>], iteration_bounds = array<i64: 2, 1>, scalar_prefetch = 0 : i64, scratch_operands = 0 : i64, tpu.core_type = #tpu.core_type<tc>, window_params = [{pipeline_mode = #tpu.pipeline_mode<synchronous>, transform_indices = @transform_0, window_bounds = array<i64: 2, 128>}, {transform_indices = @transform_1, window_bounds = array<i64: 1, 256, 128>}, {pipeline_mode = #tpu.pipeline_mode<synchronous>, transform_indices = @transform_2, window_bounds = array<i64: 128, 128>}, {transform_indices = @transform_3, window_bounds = array<i64: 1, 256, 128>}]} {
    %c0 = arith.constant 0 : index
    %c0_0 = arith.constant 0 : index
    %c0_1 = arith.constant 0 : index
    %0 = vector.load %arg3[%c0, %c0_0, %c0_1] : memref<1x256x128xbf16, #tpu.memory_space<vmem>>, vector<1x256x128xbf16>
    %1 = vector.shape_cast %0 : vector<1x256x128xbf16> to vector<256x128xbf16>
    %c0_2 = arith.constant 0 : index
    %c0_3 = arith.constant 0 : index
    %2 = vector.load %arg4[%c0_2, %c0_3] : memref<128x128xbf16, #tpu.memory_space<vmem>>, vector<128x128xbf16>
    %cst = arith.constant dense<0.000000e+00> : vector<256x128xf32>
    %3 = tpu.matmul %1, %2, %cst {dimension_numbers = #tpu.dot_dimension_numbers<[1], [0], [0], [1], [0, 0, 1, 1], [], []>} : vector<256x128xbf16>, vector<128x128xbf16>, vector<256x128xf32> -> vector<256x128xf32>
    %c0_4 = arith.constant 0 : index
    %c0_5 = arith.constant 0 : index
    %4 = vector.load %arg2[%c0_4, %c0_5] : memref<2x128xf32, #tpu.memory_space<vmem>>, vector<1x128xf32>
    %5 = vector.broadcast %4 : vector<1x128xf32> to vector<256x128xf32>
    %6 = arith.mulf %3, %5 : vector<256x128xf32>
    %c1 = arith.constant 1 : index
    %c0_6 = arith.constant 0 : index
    %7 = vector.load %arg2[%c1, %c0_6] : memref<2x128xf32, #tpu.memory_space<vmem>>, vector<1x128xf32>
    %8 = vector.broadcast %7 : vector<1x128xf32> to vector<256x128xf32>
    %9 = arith.addf %6, %8 : vector<256x128xf32>
    %cst_7 = arith.constant 0.000000e+00 : f32
    %10 = vector.broadcast %cst_7 : f32 to vector<256x128xf32>
    %11 = arith.maximumf %9, %10 : vector<256x128xf32>
    %c0_8 = arith.constant 0 : index
    %c0_9 = arith.constant 0 : index
    %c0_10 = arith.constant 0 : index
    %12 = vector.load %arg5[%c0_8, %c0_9, %c0_10] : memref<1x256x128xf32, #tpu.memory_space<vmem>>, vector<1x256x128xf32>
    %13 = vector.shape_cast %12 : vector<1x256x128xf32> to vector<256x128xf32>
    %14 = vector.shape_cast %11 : vector<256x128xf32> to vector<1x256x128xf32>
    tpu.vector_store %arg5[%c0_8, %c0_9, %c0_10], %14 {strides = array<i32>} : memref<1x256x128xf32, #tpu.memory_space<vmem>>, vector<1x256x128xf32>,
    return
  }
  func.func @transform_0(%arg0: i32, %arg1: i32) -> (i32, i32) {
    %c0_i32 = arith.constant 0 : i32
    %c0_i32_0 = arith.constant 0 : i32
    %c0_i32_1 = arith.constant 0 : i32
    return %c0_i32, %c0_i32_0 : i32, i32
  }
  func.func @transform_1(%arg0: i32, %arg1: i32) -> (i32, i32, i32) {
    %c0_i32 = arith.constant 0 : i32
    %c0_i32_0 = arith.constant 0 : i32
    return %arg0, %arg1, %c0_i32 : i32, i32, i32
  }
  func.func @transform_2(%arg0: i32, %arg1: i32) -> (i32, i32) {
    %c0_i32 = arith.constant 0 : i32
    %c0_i32_0 = arith.constant 0 : i32
    %c0_i32_1 = arith.constant 0 : i32
    return %c0_i32, %c0_i32_0 : i32, i32
  }
  func.func @transform_3(%arg0: i32, %arg1: i32) -> (i32, i32, i32) {
    %c0_i32 = arith.constant 0 : i32
    %c0_i32_0 = arith.constant 0 : i32
    return %arg0, %arg1, %c0_i32 : i32, i32, i32
  }
}

</mosaic_0001>

<llo_original>
// kernel: block_forward.2
$region0: #{block_forward.2}
  #allocation0 [shape = 'u32[]', space=smem, size = 0x4, offset = 0x4, fixed_abs, tag = 'smem constant byte address 0x4 - core index']
  #allocation1 [shape = 'u32[72,128]{1,0:T(1,128)}', space=vmem, size = 0x9000, scoped, tag = 'internal scratch']
  %s0 = inlined_call_operand.vmem [shape: bf16[2,256,128], index: 0, kind: input, shape index: {}]
  %s1 = inlined_call_operand.vmem [shape: bf16[128,128], index: 1, kind: input, shape index: {}]
  %s2 = inlined_call_operand.vmem [shape: f32[2,1,2,128], index: 2, kind: output, shape index: {}]
  %s3 = sld [smem:[#allocation0]]
  $region41: #{block_forward.2} parent=0
    _
  %s5 = ssub.s32 1, %s3
  %s6 = scalar_select 0, %s5, %s3
  loop: start=0, step=1, limit=4
  $region2: #{block_forward.2} parent=0 // loop_pre_header
    _
  $region3: #{block_forward.2} parent=0 // loop_header
    %s8 = sphi 0, %s12
    %p9 = scmp.ge.s32.totalorder %s8, 4
    %s15 = sphi 0, %s27
    %s16 = sphi 0, %s23
    %s17 = sphi 0, %s15
    %s18 = sphi 0, %s16
    %s19 = sphi 0, %s17
    %s20 = sphi 0, %s18
    %s32 = sphi 0, %s34
    %s35 = sphi 0, %s32
    %s36 = sphi 0, %s35
    %s52 = sphi 0, %s36
    %s56 = sphi 0, %s56
    %s58 = sphi 0, %s56
    %s59 = sphi 0, %s58
    %s73 = sphi 0, %s59
    %s81 = sphi 0, %s83
    %s84 = sphi 0, %s81
    %s85 = sphi 0, %s84
    %s101 = sphi 0, %s85
  $region4: #{block_forward.2} parent=0 // loop_header_branch
    %11 = sbr.rel (%p9) target = $region8
  $region5: #{block_forward.2} parent=0 // loop_body
    %s13 = ssub.s32 %s8, 1
    %s14 = ssub.s32 %s8, 2
    %s21 = sadd.s32 1, %s16
    %p22 = scmp.ge.s32.totalorder %s21, 1
    %s23 = scalar_select %p22, 0, %s21
    %s24 = sadd.s32 1, %s15
    %s25 = scalar_select %p22, %s24, %s15
    %p26 = scmp.ge.s32.totalorder %s25, 2
    %s27 = scalar_select %p26, 0, %s25
    %s28 = ssub.s32 %s15, %s27
    %s29 = ssub.s32 %s16, %s23
    %s30 = sor.u32 %s28, %s29
    %p31 = scmp.eq.s32.totalorder %s30, 0
    %s33 = sadd.s32 %s32, 1
    %s34 = scalar_select %p31, %s32, %s33
    %p37 = pneg %p31
    %p38 = scmp.eq.s32.totalorder %s8, 1
    %p39 = por %p37, %p38
    %p40 = scmp.ne.s32.totalorder %s32, %s35
    %p41 = scmp.eq.s32.totalorder %s8, 0
    %p42 = por %p40, %p41
    %p43 = scmp.ne.s32.totalorder %s32, %s35
    %p44 = scmp.eq.s32.totalorder %s13, 1
    %p45 = por %p43, %p44
    %p46 = scmp.ne.s32.totalorder %s35, %s36
    %p47 = scmp.eq.s32.totalorder %s13, 0
    %p48 = por %p46, %p47
    %p49 = scmp.ne.s32.totalorder %s35, %s36
    %p50 = scmp.eq.s32.totalorder %s14, 1
    %p51 = por %p49, %p50
    %p53 = scmp.ne.s32.totalorder %s36, %s52
    %p54 = scmp.eq.s32.totalorder %s14, 0
    %p55 = por %p53, %p54
    %s57 = sadd.s32 %s56, 1
    %p60 = scmp.eq.s32.totalorder %s8, 1
    %p61 = scmp.ne.s32.totalorder %s56, %s58
    %p62 = scmp.eq.s32.totalorder %s8, 0
    %p63 = por %p61, %p62
    %p64 = scmp.ne.s32.totalorder %s56, %s58
    %p65 = scmp.eq.s32.totalorder %s13, 1
    %p66 = por %p64, %p65
    %p67 = scmp.ne.s32.totalorder %s58, %s59
    %p68 = scmp.eq.s32.totalorder %s13, 0
    %p69 = por %p67, %p68
    %p70 = scmp.ne.s32.totalorder %s58, %s59
    %p71 = scmp.eq.s32.totalorder %s14, 1
    %p72 = por %p70, %p71
    %p74 = scmp.ne.s32.totalorder %s59, %s73
    %p75 = scmp.eq.s32.totalorder %s14, 0
    %p76 = por %p74, %p75
    %s77 = ssub.s32 %s15, %s27
    %s78 = ssub.s32 %s16, %s23
    %s79 = sor.u32 %s77, %s78
    %p80 = scmp.eq.s32.totalorder %s79, 0
    %s82 = sadd.s32 %s81, 1
    %s83 = scalar_select %p80, %s81, %s82
    %p86 = pneg %p80
    %p87 = scmp.eq.s32.totalorder %s8, 1
    %p88 = por %p86, %p87
    %p89 = scmp.ne.s32.totalorder %s81, %s84
    %p90 = scmp.eq.s32.totalorder %s8, 0
    %p91 = por %p89, %p90
    %p92 = scmp.ne.s32.totalorder %s81, %s84
    %p93 = scmp.eq.s32.totalorder %s13, 1
    %p94 = por %p92, %p93
    %p95 = scmp.ne.s32.totalorder %s84, %s85
    %p96 = scmp.eq.s32.totalorder %s13, 0
    %p97 = por %p95, %p96
    %p98 = scmp.ne.s32.totalorder %s84, %s85
    %p99 = scmp.eq.s32.totalorder %s14, 1
    %p100 = por %p98, %p99
    %p102 = scmp.ne.s32.totalorder %s85, %s101
    %p103 = scmp.eq.s32.totalorder %s14, 0
    %p104 = por %p102, %p103
    %p105 = scmp.le.s32.totalorder 1, %s8
    %p106 = scmp.lt.s32.totalorder %s8, 3
    %p107 = pnand %p105, %p106
    %p108 = pneg %p107
    // Predicated region
    $region9: #{block_forward.2} parent=5 // pred_check
      _
    $region10: #{block_forward.2} parent=5 // pred_check_branch
      %110 = sbr.rel (%p107) target = $region12
    $region11: #{block_forward.2} parent=5 // pred_region
      %s111 = ssub.s32 %s8, 1
      // Predicated region
      $region13: #{block_forward.2} parent=11 // pred_check
        %p112 = pneg %p69
      $region14: #{block_forward.2} parent=11 // pred_check_branch
        %114 = sbr.rel (%p112) target = $region16
      $region15: #{block_forward.2} parent=11 // pred_region
        _
      $region16: #{block_forward.2} parent=11 // pred_fallthru
        _
    $region12: #{block_forward.2} parent=5 // pred_fallthru
      _
    %p115 = scmp.lt.s32.totalorder %s8, 2
    // Predicated region
    $region17: #{block_forward.2} parent=5 // pred_check
      %p116 = pneg %p115
    $region18: #{block_forward.2} parent=5 // pred_check_branch
      %118 = sbr.rel (%p116) target = $region20
    $region19: #{block_forward.2} parent=5 // pred_region
      // Predicated region
      $region21: #{block_forward.2} parent=19 // pred_check
        %p119 = pneg %p42
      $region22: #{block_forward.2} parent=19 // pred_check_branch
        %121 = sbr.rel (%p119) target = $region24
      $region23: #{block_forward.2} parent=19 // pred_region
        %s122 = smul.u32 32, %s16
        %p123 = scmp.lt.s32.totalorder %s15, 1
        %s124 = scalar_select %p123, %s15, 1
        %p125 = scmp.lt.s32.totalorder %s122, 31
        %s126 = scalar_select %p125, %s122, 31
        %s127 = smul.addr %s124, 32
        %s128 = sadd.s32 %s126, %s127
        %s129 = smul.addr %s128, 4
        %s130 = scalar_lea.vmem %s0, %s129
        %s131 = smul.u32 32, %s16
      $region24: #{block_forward.2} parent=19 // pred_fallthru
        _
    $region20: #{block_forward.2} parent=5 // pred_fallthru
      _
    %p132 = scmp.le.s32.totalorder 1, %s8
    %p133 = scmp.lt.s32.totalorder %s8, 3
    %p134 = pnand %p132, %p133
    %p135 = pneg %p134
    // Predicated region
    $region25: #{block_forward.2} parent=5 // pred_check
      _
    $region26: #{block_forward.2} parent=5 // pred_check_branch
      %137 = sbr.rel (%p134) target = $region28
    $region27: #{block_forward.2} parent=5 // pred_region
      %s138 = ssub.s32 %s8, 1
      %s139 = smul.u32 32, %s18
      %p140 = scmp.lt.s32.totalorder %s17, 1
      %s141 = scalar_select %p140, %s17, 1
      %p142 = scmp.lt.s32.totalorder %s139, 31
      %s143 = scalar_select %p142, %s139, 31
      %s144 = smul.addr %s141, 32
      %s145 = sadd.s32 %s143, %s144
      %s146 = smul.addr %s145, 4
      %s147 = scalar_lea.vmem %s0, %s146
      %p148 = pneg %p48
      %p149 = pneg %p45
      %p150 = pneg %p69
      %p151 = pneg %p66
      %p152 = pneg %p97
      %p153 = pneg %p94
      %p154 = scmp.lt.s32.totalorder %s17, 1
      %s155 = scalar_select %p154, %s17, 1
      %p156 = scmp.lt.s32.totalorder %s18, 0
      %s157 = scalar_select %p156, %s18, 0
      %s158 = sadd.s32 %s157, %s155
      %s159 = smul.addr %s158, 2
      %s160 = scalar_lea.vmem %s2, %s159
      %s161 = smul.u32 32, %s18
      %p162 = scmp.lt.s32.totalorder %s17, 1
      %s163 = scalar_select %p162, %s17, 1
      %p164 = scmp.lt.s32.totalorder %s161, 31
      %s165 = scalar_select %p164, %s161, 31
      %s166 = smul.addr %s163, 32
      %s167 = sadd.s32 %s165, %s166
      %s168 = smul.addr %s167, 4
      %s169 = scalar_lea.vmem %s0, %s168
      %s170 = smul.u32 32, %s18
      %p171 = scmp.lt.s32.totalorder %s17, 1
      %s172 = scalar_select %p171, %s17, 1
      %p173 = scmp.lt.s32.totalorder %s18, 0
      %s174 = scalar_select %p173, %s18, 0
      %s175 = sadd.s32 %s174, %s172
      %s176 = smul.addr %s175, 2
      %s177 = scalar_lea.vmem %s2, %s176
      %v178 = vld [vmem:[%s169] sm:$0xf]
      %v179 = vld [vmem:[%s169 + $0x4] sm:$0xf]
      %v180 = vld [vmem:[%s169 + $0x8] sm:$0xf]
      %v181 = vld [vmem:[%s169 + $0xc] sm:$0xf]
      %v182 = vld [vmem:[%s169 + $0x10] sm:$0xf]
      %v183 = vld [vmem:[%s169 + $0x14] sm:$0xf]
      %v184 = vld [vmem:[%s169 + $0x18] sm:$0xf]
      %v185 = vld [vmem:[%s169 + $0x1c] sm:$0xf]
      %v186 = vld [vmem:[%s169 + $0x20] sm:$0xf]
      %v187 = vld [vmem:[%s169 + $0x24] sm:$0xf]
      %v188 = vld [vmem:[%s169 + $0x28] sm:$0xf]
      %v189 = vld [vmem:[%s169 + $0x2c] sm:$0xf]
      %v190 = vld [vmem:[%s169 + $0x30] sm:$0xf]
      %v191 = vld [vmem:[%s169 + $0x34] sm:$0xf]
      %v192 = vld [vmem:[%s169 + $0x38] sm:$0xf]
      %v193 = vld [vmem:[%s169 + $0x3c] sm:$0xf]
      %v194 = vld [vmem:[%s169 + $0x40] sm:$0xf]
      %v195 = vld [vmem:[%s169 + $0x44] sm:$0xf]
      %v196 = vld [vmem:[%s169 + $0x48] sm:$0xf]
      %v197 = vld [vmem:[%s169 + $0x4c] sm:$0xf]
      %v198 = vld [vmem:[%s169 + $0x50] sm:$0xf]
      %v199 = vld [vmem:[%s169 + $0x54] sm:$0xf]
      %v200 = vld [vmem:[%s169 + $0x58] sm:$0xf]
      %v201 = vld [vmem:[%s169 + $0x5c] sm:$0xf]
      %v202 = vld [vmem:[%s169 + $0x60] sm:$0xf]
      %v203 = vld [vmem:[%s169 + $0x64] sm:$0xf]
      %v204 = vld [vmem:[%s169 + $0x68] sm:$0xf]
      %v205 = vld [vmem:[%s169 + $0x6c] sm:$0xf]
      %v206 = vld [vmem:[%s169 + $0x70] sm:$0xf]
      %v207 = vld [vmem:[%s169 + $0x74] sm:$0xf]
      %v208 = vld [vmem:[%s169 + $0x78] sm:$0xf]
      %v209 = vld [vmem:[%s169 + $0x7c] sm:$0xf]
      %v210 = vld [vmem:[%s1] sm:$0xf]
      %v211 = vld [vmem:[%s1 + $0x4] sm:$0xf]
      %v212 = vld [vmem:[%s1 + $0x8] sm:$0xf]
      %v213 = vld [vmem:[%s1 + $0xc] sm:$0xf]
      %v214 = vld [vmem:[%s1 + $0x10] sm:$0xf]
      %v215 = vld [vmem:[%s1 + $0x14] sm:$0xf]
      %v216 = vld [vmem:[%s1 + $0x18] sm:$0xf]
      %v217 = vld [vmem:[%s1 + $0x1c] sm:$0xf]
      %v218 = vld [vmem:[%s1 + $0x20] sm:$0xf]
      %v219 = vld [vmem:[%s1 + $0x24] sm:$0xf]
      %v220 = vld [vmem:[%s1 + $0x28] sm:$0xf]
      %v221 = vld [vmem:[%s1 + $0x2c] sm:$0xf]
      %v222 = vld [vmem:[%s1 + $0x30] sm:$0xf]
      %v223 = vld [vmem:[%s1 + $0x34] sm:$0xf]
      %v224 = vld [vmem:[%s1 + $0x38] sm:$0xf]
      %v225 = vld [vmem:[%s1 + $0x3c] sm:$0xf]
      %v258 = vunpack.c.l.b16 %v178
      %v259 = vunpack.c.l.b16 %v179
      %v260 = vunpack.c.l.b16 %v180
      %v261 = vunpack.c.l.b16 %v181
      %v262 = vunpack.c.l.b16 %v182
      %v263 = vunpack.c.l.b16 %v183
      %v264 = vunpack.c.l.b16 %v184
      %v265 = vunpack.c.l.b16 %v185
      %v266 = vunpack.c.l.b16 %v186
      %v267 = vunpack.c.l.b16 %v187
      %v268 = vunpack.c.l.b16 %v188
      %v269 = vunpack.c.l.b16 %v189
      %v270 = vunpack.c.l.b16 %v190
      %v271 = vunpack.c.l.b16 %v191
      %v272 = vunpack.c.l.b16 %v192
      %v273 = vunpack.c.l.b16 %v193
      %v274 = vunpack.c.l.b16 %v194
      %v275 = vunpack.c.l.b16 %v195
      %v276 = vunpack.c.l.b16 %v196
      %v277 = vunpack.c.l.b16 %v197
      %v278 = vunpack.c.l.b16 %v198
      %v279 = vunpack.c.l.b16 %v199
      %v280 = vunpack.c.l.b16 %v200
      %v281 = vunpack.c.l.b16 %v201
      %v282 = vunpack.c.l.b16 %v202
      %v283 = vunpack.c.l.b16 %v203
      %v284 = vunpack.c.l.b16 %v204
      %v285 = vunpack.c.l.b16 %v205
      %v286 = vunpack.c.l.b16 %v206
      %v287 = vunpack.c.l.b16 %v207
      %v288 = vunpack.c.l.b16 %v208
      %v289 = vunpack.c.l.b16 %v209
      %v290 = vpack.c.b16 %v259, %v258
      %v291 = vpack.c.b16 %v261, %v260
      %v292 = vpack.c.b16 %v263, %v262
      %v293 = vpack.c.b16 %v265, %v264
      %v294 = vpack.c.b16 %v267, %v266
      %v295 = vpack.c.b16 %v269, %v268
      %v296 = vpack.c.b16 %v271, %v270
      %v297 = vpack.c.b16 %v273, %v272
      %v298 = vpack.c.b16 %v275, %v274
      %v299 = vpack.c.b16 %v277, %v276
      %v300 = vpack.c.b16 %v279, %v278
      %v301 = vpack.c.b16 %v281, %v280
      %v302 = vpack.c.b16 %v283, %v282
      %v303 = vpack.c.b16 %v285, %v284
      %v304 = vpack.c.b16 %v287, %v286
      %v305 = vpack.c.b16 %v289, %v288
      %v338 = vunpack.c.l.b16 %v210
      %v339 = vunpack.c.l.b16 %v211
      %v340 = vunpack.c.l.b16 %v212
      %v341 = vunpack.c.l.b16 %v213
      %v342 = vunpack.c.l.b16 %v214
      %v343 = vunpack.c.l.b16 %v215
      %v344 = vunpack.c.l.b16 %v216
      %v345 = vunpack.c.l.b16 %v217
      %v346 = vunpack.c.l.b16 %v218
      %v347 = vunpack.c.l.b16 %v219
      %v348 = vunpack.c.l.b16 %v220
      %v349 = vunpack.c.l.b16 %v221
      %v350 = vunpack.c.l.b16 %v222
      %v351 = vunpack.c.l.b16 %v223
      %v352 = vunpack.c.l.b16 %v224
      %v353 = vunpack.c.l.b16 %v225
      %v354 = vpack.c.b16 %v339, %v338
      %v355 = vpack.c.b16 %v341, %v340
      %v356 = vpack.c.b16 %v343, %v342
      %v357 = vpack.c.b16 %v345, %v344
      %v358 = vpack.c.b16 %v347, %v346
      %v359 = vpack.c.b16 %v349, %v348
      %v360 = vpack.c.b16 %v351, %v350
      %v361 = vpack.c.b16 %v353, %v352
      %370 = vmatpush.bf16.msra.mxu0 %v361
      %371 = vmatpush.bf16.msra.mxu0 %v360
      %372 = vmatpush.bf16.msra.mxu0 %v359
      %373 = vmatpush.bf16.msra.mxu0 %v358
      %374 = vmatpush.bf16.msra.mxu0 %v357
      %375 = vmatpush.bf16.msra.mxu0 %v356
      %376 = vmatpush.bf16.msra.mxu0 %v355
      %377 = vmatpush.bf16.msra.mxu0 %v354
      %378 = vmatmul.bf16.gmra.mxu0 %v290
      %v379 = vpop.f32.mrf.mxu0
      %v380 = vadd.f32 0.0, %v379
      %v381 = vpop.f32.mrf.mxu0
      %v382 = vadd.f32 0.0, %v381
      %383 = vmatmul.bf16.gmra.mxu0 %v291
      %v384 = vpop.f32.mrf.mxu0
      %v385 = vadd.f32 0.0, %v384
      %v386 = vpop.f32.mrf.mxu0
      %v387 = vadd.f32 0.0, %v386
      %388 = vmatmul.bf16.gmra.mxu0 %v292
      %v389 = vpop.f32.mrf.mxu0
      %v390 = vadd.f32 0.0, %v389
      %v391 = vpop.f32.mrf.mxu0
      %v392 = vadd.f32 0.0, %v391
      %393 = vmatmul.bf16.gmra.mxu0 %v293
      %v394 = vpop.f32.mrf.mxu0
      %v395 = vadd.f32 0.0, %v394
      %v396 = vpop.f32.mrf.mxu0
      %v397 = vadd.f32 0.0, %v396
      %398 = vmatmul.bf16.gmra.mxu0 %v294
      %v399 = vpop.f32.mrf.mxu0
      %v400 = vadd.f32 0.0, %v399
      %v401 = vpop.f32.mrf.mxu0
      %v402 = vadd.f32 0.0, %v401
      %403 = vmatmul.bf16.gmra.mxu0 %v295
      %v404 = vpop.f32.mrf.mxu0
      %v405 = vadd.f32 0.0, %v404
      %v406 = vpop.f32.mrf.mxu0
      %v407 = vadd.f32 0.0, %v406
      %408 = vmatmul.bf16.gmra.mxu0 %v296
      %v409 = vpop.f32.mrf.mxu0
      %v410 = vadd.f32 0.0, %v409
      %v411 = vpop.f32.mrf.mxu0
      %v412 = vadd.f32 0.0, %v411
      %413 = vmatmul.bf16.gmra.mxu0 %v297
      %v414 = vpop.f32.mrf.mxu0
      %v415 = vadd.f32 0.0, %v414
      %v416 = vpop.f32.mrf.mxu0
      %v417 = vadd.f32 0.0, %v416
      %418 = vmatmul.bf16.gmra.mxu0 %v298
      %v419 = vpop.f32.mrf.mxu0
      %v420 = vadd.f32 0.0, %v419
      %v421 = vpop.f32.mrf.mxu0
      %v422 = vadd.f32 0.0, %v421
      %423 = vmatmul.bf16.gmra.mxu0 %v299
      %v424 = vpop.f32.mrf.mxu0
      %v425 = vadd.f32 0.0, %v424
      %v426 = vpop.f32.mrf.mxu0
      %v427 = vadd.f32 0.0, %v426
      %428 = vmatmul.bf16.gmra.mxu0 %v300
      %v429 = vpop.f32.mrf.mxu0
      %v430 = vadd.f32 0.0, %v429
      %v431 = vpop.f32.mrf.mxu0
      %v432 = vadd.f32 0.0, %v431
      %433 = vmatmul.bf16.gmra.mxu0 %v301
      %v434 = vpop.f32.mrf.mxu0
      %v435 = vadd.f32 0.0, %v434
      %v436 = vpop.f32.mrf.mxu0
      %v437 = vadd.f32 0.0, %v436
      %438 = vmatmul.bf16.gmra.mxu0 %v302
      %v439 = vpop.f32.mrf.mxu0
      %v440 = vadd.f32 0.0, %v439
      %v441 = vpop.f32.mrf.mxu0
      %v442 = vadd.f32 0.0, %v441
      %443 = vmatmul.bf16.gmra.mxu0 %v303
      %v444 = vpop.f32.mrf.mxu0
      %v445 = vadd.f32 0.0, %v444
      %v446 = vpop.f32.mrf.mxu0
      %v447 = vadd.f32 0.0, %v446
      %448 = vmatmul.bf16.gmra.mxu0 %v304
      %v449 = vpop.f32.mrf.mxu0
      %v450 = vadd.f32 0.0, %v449
      %v451 = vpop.f32.mrf.mxu0
      %v452 = vadd.f32 0.0, %v451
      %453 = vmatmul.bf16.gmra.mxu0 %v305
      %v454 = vpop.f32.mrf.mxu0
      %v455 = vadd.f32 0.0, %v454
      %v456 = vpop.f32.mrf.mxu0
      %v457 = vadd.f32 0.0, %v456
      %458 = vdwg.mxu0
      %v459 = vadd.f32 %v380, %v382
      %v460 = vadd.f32 %v459, %v385
      %v461 = vadd.f32 %v460, %v387
      %v462 = vadd.f32 %v461, %v390
      %v463 = vadd.f32 %v462, %v392
      %v464 = vadd.f32 %v463, %v395
      %v465 = vadd.f32 %v464, %v397
      %v466 = vadd.f32 %v465, %v400
      %v467 = vadd.f32 %v466, %v402
      %v468 = vadd.f32 %v467, %v405
      %v469 = vadd.f32 %v468, %v407
      %v470 = vadd.f32 %v469, %v410
      %v471 = vadd.f32 %v470, %v412
      %v472 = vadd.f32 %v471, %v415
      %v473 = vadd.f32 %v472, %v417
      %v474 = vadd.f32 %v473, %v420
      %v475 = vadd.f32 %v474, %v422
      %v476 = vadd.f32 %v475, %v425
      %v477 = vadd.f32 %v476, %v427
      %v478 = vadd.f32 %v477, %v430
      %v479 = vadd.f32 %v478, %v432
      %v480 = vadd.f32 %v479, %v435
      %v481 = vadd.f32 %v480, %v437
      %v482 = vadd.f32 %v481, %v440
      %v483 = vadd.f32 %v482, %v442
      %v484 = vadd.f32 %v483, %v445
      %v485 = vadd.f32 %v484, %v447
      %v486 = vadd.f32 %v485, %v450
      %v487 = vadd.f32 %v486, %v452
      %v488 = vadd.f32 %v487, %v455
      %v489 = vadd.f32 %v488, %v457
      %v490 = vrot.slane %v489, 4
      %v491 = vadd.f32 %v489, %v490
      %v492 = vrot.slane %v491, 2
      %v493 = vadd.f32 %v491, %v492
      %v494 = vrot.slane %v493, 1
      %v495 = vadd.f32 %v493, %v494
      %v496 = vmul.f32 %v380, %v380
      %v497 = vmul.f32 %v382, %v382
      %v498 = vmul.f32 %v385, %v385
      %v499 = vmul.f32 %v387, %v387
      %v500 = vmul.f32 %v390, %v390
      %v501 = vmul.f32 %v392, %v392
      %v502 = vmul.f32 %v395, %v395
      %v503 = vmul.f32 %v397, %v397
      %v504 = vmul.f32 %v400, %v400
      %v505 = vmul.f32 %v402, %v402
      %v506 = vmul.f32 %v405, %v405
      %v507 = vmul.f32 %v407, %v407
      %v508 = vmul.f32 %v410, %v410
      %v509 = vmul.f32 %v412, %v412
      %v510 = vmul.f32 %v415, %v415
      %v511 = vmul.f32 %v417, %v417
      %v512 = vmul.f32 %v420, %v420
      %v513 = vmul.f32 %v422, %v422
      %v514 = vmul.f32 %v425, %v425
      %v515 = vmul.f32 %v427, %v427
      %v516 = vmul.f32 %v430, %v430
      %v517 = vmul.f32 %v432, %v432
      %v518 = vmul.f32 %v435, %v435
      %v519 = vmul.f32 %v437, %v437
      %v520 = vmul.f32 %v440, %v440
      %v521 = vmul.f32 %v442, %v442
      %v522 = vmul.f32 %v445, %v445
      %v523 = vmul.f32 %v447, %v447
      %v524 = vmul.f32 %v450, %v450
      %v525 = vmul.f32 %v452, %v452
      %v526 = vmul.f32 %v455, %v455
      %v527 = vmul.f32 %v457, %v457
      %v528 = vadd.f32 %v496, %v497
      %v529 = vadd.f32 %v528, %v498
      %v530 = vadd.f32 %v529, %v499
      %v531 = vadd.f32 %v530, %v500
      %v532 = vadd.f32 %v531, %v501
      %v533 = vadd.f32 %v532, %v502
      %v534 = vadd.f32 %v533, %v503
      %v535 = vadd.f32 %v534, %v504
      %v536 = vadd.f32 %v535, %v505
      %v537 = vadd.f32 %v536, %v506
      %v538 = vadd.f32 %v537, %v507
      %v539 = vadd.f32 %v538, %v508
      %v540 = vadd.f32 %v539, %v509
      %v541 = vadd.f32 %v540, %v510
      %v542 = vadd.f32 %v541, %v511
      %v543 = vadd.f32 %v542, %v512
      %v544 = vadd.f32 %v543, %v513
      %v545 = vadd.f32 %v544, %v514
      %v546 = vadd.f32 %v545, %v515
      %v547 = vadd.f32 %v546, %v516
      %v548 = vadd.f32 %v547, %v517
      %v549 = vadd.f32 %v548, %v518
      %v550 = vadd.f32 %v549, %v519
      %v551 = vadd.f32 %v550, %v520
      %v552 = vadd.f32 %v551, %v521
      %v553 = vadd.f32 %v552, %v522
      %v554 = vadd.f32 %v553, %v523
      %v555 = vadd.f32 %v554, %v524
      %v556 = vadd.f32 %v555, %v525
      %v557 = vadd.f32 %v556, %v526
      %v558 = vadd.f32 %v557, %v527
      %v559 = vrot.slane %v558, 4
      %v560 = vadd.f32 %v558, %v559
      %v561 = vrot.slane %v560, 2
      %v562 = vadd.f32 %v560, %v561
      %v563 = vrot.slane %v562, 1
      %v564 = vadd.f32 %v562, %v563
      %vm565 = vcmask 1040384
      %v566 = vsel %vm565, %v495, %v564
      %567 = vst [vmem:[%s177] sm:$0x3] %v566
      %p568 = scmp.lt.s32.totalorder %s17, 1
      %s569 = scalar_select %p568, %s17, 1
      %p570 = scmp.lt.s32.totalorder %s18, 0
      %s571 = scalar_select %p570, %s18, 0
      %s572 = sadd.s32 %s571, %s569
      %s573 = smul.addr %s572, 2
      %s574 = scalar_lea.vmem %s2, %s573
      // Predicated region
      $region29: #{block_forward.2} parent=27 // pred_check
        %p575 = pneg %p94
      $region30: #{block_forward.2} parent=27 // pred_check_branch
        %577 = sbr.rel (%p575) target = $region32
      $region31: #{block_forward.2} parent=27 // pred_region
        _
      $region32: #{block_forward.2} parent=27 // pred_fallthru
        _
    $region28: #{block_forward.2} parent=5 // pred_fallthru
      _
    %p578 = scmp.le.s32.totalorder 2, %s8
    // Predicated region
    $region33: #{block_forward.2} parent=5 // pred_check
      %p579 = pneg %p578
    $region34: #{block_forward.2} parent=5 // pred_check_branch
      %581 = sbr.rel (%p579) target = $region36
    $region35: #{block_forward.2} parent=5 // pred_region
      %s582 = ssub.s32 %s8, 2
      // Predicated region
      $region37: #{block_forward.2} parent=35 // pred_check
        %p583 = pneg %p100
      $region38: #{block_forward.2} parent=35 // pred_check_branch
        %585 = sbr.rel (%p583) target = $region40
      $region39: #{block_forward.2} parent=35 // pred_region
        %p586 = scmp.lt.s32.totalorder %s19, 1
        %s587 = scalar_select %p586, %s19, 1
        %p588 = scmp.lt.s32.totalorder %s20, 0
        %s589 = scalar_select %p588, %s20, 0
        %s590 = sadd.s32 %s589, %s587
        %s591 = smul.addr %s590, 2
        %s592 = scalar_lea.vmem %s2, %s591
      $region40: #{block_forward.2} parent=35 // pred_fallthru
        _
    $region36: #{block_forward.2} parent=5 // pred_fallthru
      _
  $region6: #{block_forward.2} parent=0 // loop_footer
    %s12 = sadd.s32 1, %s8
  $region7: #{block_forward.2} parent=0 // loop_footer_branch
    %7 = sbr.rel target = $region3
  $region8: #{block_forward.2} parent=0 // loop_exit
    _

// kernel: block_forward.3
$region0: #{block_forward.3}
  #allocation0 [shape = 'u32[]', space=smem, size = 0x4, offset = 0x4, fixed_abs, tag = 'smem constant byte address 0x4 - core index']
  #allocation1 [shape = 'u32[72,128]{1,0:T(1,128)}', space=vmem, size = 0x9000, scoped, tag = 'internal scratch']
  %s0 = inlined_call_operand.vmem [shape: f32[2,128], index: 0, kind: input, shape index: {}]
  %s1 = inlined_call_operand.vmem [shape: bf16[2,256,128], index: 1, kind: input, shape index: {}]
  %s2 = inlined_call_operand.vmem [shape: bf16[128,128], index: 2, kind: input, shape index: {}]
  %s3 = inlined_call_operand.vmem [shape: f32[2,256,128], index: 3, kind: output, shape index: {}]
  %s4 = sld [smem:[#allocation0]]
  $region45: #{block_forward.3} parent=0
    _
  %s6 = ssub.s32 1, %s4
  %s7 = scalar_select 0, %s6, %s4
  loop: start=0, step=1, limit=4
  $region2: #{block_forward.3} parent=0 // loop_pre_header
    _
  $region3: #{block_forward.3} parent=0 // loop_header
    %s9 = sphi 0, %s13
    %p10 = scmp.ge.s32.totalorder %s9, 4
    %s16 = sphi 0, %s28
    %s17 = sphi 0, %s24
    %s18 = sphi 0, %s16
    %s19 = sphi 0, %s17
    %s20 = sphi 0, %s18
    %s21 = sphi 0, %s19
    %s29 = sphi 0, %s29
    %s31 = sphi 0, %s29
    %s32 = sphi 0, %s31
    %s46 = sphi 0, %s32
    %s54 = sphi 0, %s56
    %s57 = sphi 0, %s54
    %s58 = sphi 0, %s57
    %s74 = sphi 0, %s58
    %s78 = sphi 0, %s78
    %s80 = sphi 0, %s78
    %s81 = sphi 0, %s80
    %s95 = sphi 0, %s81
    %s103 = sphi 0, %s105
    %s106 = sphi 0, %s103
    %s107 = sphi 0, %s106
    %s123 = sphi 0, %s107
  $region4: #{block_forward.3} parent=0 // loop_header_branch
    %12 = sbr.rel (%p10) target = $region8
  $region5: #{block_forward.3} parent=0 // loop_body
    %s14 = ssub.s32 %s9, 1
    %s15 = ssub.s32 %s9, 2
    %s22 = sadd.s32 1, %s17
    %p23 = scmp.ge.s32.totalorder %s22, 1
    %s24 = scalar_select %p23, 0, %s22
    %s25 = sadd.s32 1, %s16
    %s26 = scalar_select %p23, %s25, %s16
    %p27 = scmp.ge.s32.totalorder %s26, 2
    %s28 = scalar_select %p27, 0, %s26
    %s30 = sadd.s32 %s29, 1
    %p33 = scmp.eq.s32.totalorder %s9, 1
    %p34 = scmp.ne.s32.totalorder %s29, %s31
    %p35 = scmp.eq.s32.totalorder %s9, 0
    %p36 = por %p34, %p35
    %p37 = scmp.ne.s32.totalorder %s29, %s31
    %p38 = scmp.eq.s32.totalorder %s14, 1
    %p39 = por %p37, %p38
    %p40 = scmp.ne.s32.totalorder %s31, %s32
    %p41 = scmp.eq.s32.totalorder %s14, 0
    %p42 = por %p40, %p41
    %p43 = scmp.ne.s32.totalorder %s31, %s32
    %p44 = scmp.eq.s32.totalorder %s15, 1
    %p45 = por %p43, %p44
    %p47 = scmp.ne.s32.totalorder %s32, %s46
    %p48 = scmp.eq.s32.totalorder %s15, 0
    %p49 = por %p47, %p48
    %s50 = ssub.s32 %s16, %s28
    %s51 = ssub.s32 %s17, %s24
    %s52 = sor.u32 %s50, %s51
    %p53 = scmp.eq.s32.totalorder %s52, 0
    %s55 = sadd.s32 %s54, 1
    %s56 = scalar_select %p53, %s54, %s55
    %p59 = pneg %p53
    %p60 = scmp.eq.s32.totalorder %s9, 1
    %p61 = por %p59, %p60
    %p62 = scmp.ne.s32.totalorder %s54, %s57
    %p63 = scmp.eq.s32.totalorder %s9, 0
    %p64 = por %p62, %p63
    %p65 = scmp.ne.s32.totalorder %s54, %s57
    %p66 = scmp.eq.s32.totalorder %s14, 1
    %p67 = por %p65, %p66
    %p68 = scmp.ne.s32.totalorder %s57, %s58
    %p69 = scmp.eq.s32.totalorder %s14, 0
    %p70 = por %p68, %p69
    %p71 = scmp.ne.s32.totalorder %s57, %s58
    %p72 = scmp.eq.s32.totalorder %s15, 1
    %p73 = por %p71, %p72
    %p75 = scmp.ne.s32.totalorder %s58, %s74
    %p76 = scmp.eq.s32.totalorder %s15, 0
    %p77 = por %p75, %p76
    %s79 = sadd.s32 %s78, 1
    %p82 = scmp.eq.s32.totalorder %s9, 1
    %p83 = scmp.ne.s32.totalorder %s78, %s80
    %p84 = scmp.eq.s32.totalorder %s9, 0
    %p85 = por %p83, %p84
    %p86 = scmp.ne.s32.totalorder %s78, %s80
    %p87 = scmp.eq.s32.totalorder %s14, 1
    %p88 = por %p86, %p87
    %p89 = scmp.ne.s32.totalorder %s80, %s81
    %p90 = scmp.eq.s32.totalorder %s14, 0
    %p91 = por %p89, %p90
    %p92 = scmp.ne.s32.totalorder %s80, %s81
    %p93 = scmp.eq.s32.totalorder %s15, 1
    %p94 = por %p92, %p93
    %p96 = scmp.ne.s32.totalorder %s81, %s95
    %p97 = scmp.eq.s32.totalorder %s15, 0
    %p98 = por %p96, %p97
    %s99 = ssub.s32 %s16, %s28
    %s100 = ssub.s32 %s17, %s24
    %s101 = sor.u32 %s99, %s100
    %p102 = scmp.eq.s32.totalorder %s101, 0
    %s104 = sadd.s32 %s103, 1
    %s105 = scalar_select %p102, %s103, %s104
    %p108 = pneg %p102
    %p109 = scmp.eq.s32.totalorder %s9, 1
    %p110 = por %p108, %p109
    %p111 = scmp.ne.s32.totalorder %s103, %s106
    %p112 = scmp.eq.s32.totalorder %s9, 0
    %p113 = por %p111, %p112
    %p114 = scmp.ne.s32.totalorder %s103, %s106
    %p115 = scmp.eq.s32.totalorder %s14, 1
    %p116 = por %p114, %p115
    %p117 = scmp.ne.s32.totalorder %s106, %s107
    %p118 = scmp.eq.s32.totalorder %s14, 0
    %p119 = por %p117, %p118
    %p120 = scmp.ne.s32.totalorder %s106, %s107
    %p121 = scmp.eq.s32.totalorder %s15, 1
    %p122 = por %p120, %p121
    %p124 = scmp.ne.s32.totalorder %s107, %s123
    %p125 = scmp.eq.s32.totalorder %s15, 0
    %p126 = por %p124, %p125
    %p127 = scmp.le.s32.totalorder 1, %s9
    %p128 = scmp.lt.s32.totalorder %s9, 3
    %p129 = pnand %p127, %p128
    %p130 = pneg %p129
    // Predicated region
    $region9: #{block_forward.3} parent=5 // pred_check
      _
    $region10: #{block_forward.3} parent=5 // pred_check_branch
      %132 = sbr.rel (%p129) target = $region12
    $region11: #{block_forward.3} parent=5 // pred_region
      %s133 = ssub.s32 %s9, 1
      // Predicated region
      $region13: #{block_forward.3} parent=11 // pred_check
        %p134 = pneg %p42
      $region14: #{block_forward.3} parent=11 // pred_check_branch
        %136 = sbr.rel (%p134) target = $region16
      $region15: #{block_forward.3} parent=11 // pred_region
        _
      $region16: #{block_forward.3} parent=11 // pred_fallthru
        _
      // Predicated region
      $region17: #{block_forward.3} parent=11 // pred_check
        %p137 = pneg %p91
      $region18: #{block_forward.3} parent=11 // pred_check_branch
        %139 = sbr.rel (%p137) target = $region20
      $region19: #{block_forward.3} parent=11 // pred_region
        _
      $region20: #{block_forward.3} parent=11 // pred_fallthru
        _
    $region12: #{block_forward.3} parent=5 // pred_fallthru
      _
    %p140 = scmp.lt.s32.totalorder %s9, 2
    // Predicated region
    $region21: #{block_forward.3} parent=5 // pred_check
      %p141 = pneg %p140
    $region22: #{block_forward.3} parent=5 // pred_check_branch
      %143 = sbr.rel (%p141) target = $region24
    $region23: #{block_forward.3} parent=5 // pred_region
      // Predicated region
      $region25: #{block_forward.3} parent=23 // pred_check
        %p144 = pneg %p64
      $region26: #{block_forward.3} parent=23 // pred_check_branch
        %146 = sbr.rel (%p144) target = $region28
      $region27: #{block_forward.3} parent=23 // pred_region
        %s147 = smul.u32 32, %s17
        %p148 = scmp.lt.s32.totalorder %s16, 1
        %s149 = scalar_select %p148, %s16, 1
        %p150 = scmp.lt.s32.totalorder %s147, 31
        %s151 = scalar_select %p150, %s147, 31
        %s152 = smul.addr %s149, 32
        %s153 = sadd.s32 %s151, %s152
        %s154 = smul.addr %s153, 4
        %s155 = scalar_lea.vmem %s1, %s154
        %s156 = smul.u32 32, %s17
      $region28: #{block_forward.3} parent=23 // pred_fallthru
        _
    $region24: #{block_forward.3} parent=5 // pred_fallthru
      _
    %p157 = scmp.le.s32.totalorder 1, %s9
    %p158 = scmp.lt.s32.totalorder %s9, 3
    %p159 = pnand %p157, %p158
    %p160 = pneg %p159
    // Predicated region
    $region29: #{block_forward.3} parent=5 // pred_check
      _
    $region30: #{block_forward.3} parent=5 // pred_check_branch
      %162 = sbr.rel (%p159) target = $region32
    $region31: #{block_forward.3} parent=5 // pred_region
      %s163 = ssub.s32 %s9, 1
      %p164 = pneg %p42
      %p165 = pneg %p39
      %s166 = smul.u32 32, %s19
      %p167 = scmp.lt.s32.totalorder %s18, 1
      %s168 = scalar_select %p167, %s18, 1
      %p169 = scmp.lt.s32.totalorder %s166, 31
      %s170 = scalar_select %p169, %s166, 31
      %s171 = smul.addr %s168, 32
      %s172 = sadd.s32 %s170, %s171
      %s173 = smul.addr %s172, 4
      %s174 = scalar_lea.vmem %s1, %s173
      %p175 = pneg %p70
      %p176 = pneg %p67
      %p177 = pneg %p91
      %p178 = pneg %p88
      %p179 = pneg %p119
      %p180 = pneg %p116
      %s181 = smul.u32 32, %s19
      %p182 = scmp.lt.s32.totalorder %s18, 1
      %s183 = scalar_select %p182, %s18, 1
      %p184 = scmp.lt.s32.totalorder %s181, 31
      %s185 = scalar_select %p184, %s181, 31
      %s186 = smul.addr %s183, 32
      %s187 = sadd.s32 %s185, %s186
      %s188 = smul.addr %s187, 8
      %s189 = scalar_lea.vmem %s3, %s188
      %s190 = smul.u32 32, %s19
      %p191 = scmp.lt.s32.totalorder %s18, 1
      %s192 = scalar_select %p191, %s18, 1
      %p193 = scmp.lt.s32.totalorder %s190, 31
      %s194 = scalar_select %p193, %s190, 31
      %s195 = smul.addr %s192, 32
      %s196 = sadd.s32 %s194, %s195
      %s197 = smul.addr %s196, 4
      %s198 = scalar_lea.vmem %s1, %s197
      %s199 = smul.u32 32, %s19
      %s200 = smul.u32 32, %s19
      %p201 = scmp.lt.s32.totalorder %s18, 1
      %s202 = scalar_select %p201, %s18, 1
      %p203 = scmp.lt.s32.totalorder %s200, 31
      %s204 = scalar_select %p203, %s200, 31
      %s205 = smul.addr %s202, 32
      %s206 = sadd.s32 %s204, %s205
      %s207 = smul.addr %s206, 8
      %s208 = scalar_lea.vmem %s3, %s207
      %s209 = smul.u32 32, %s19
      %v210 = vld [vmem:[%s198] sm:$0xf]
      %v211 = vld [vmem:[%s198 + $0x4] sm:$0xf]
      %v212 = vld [vmem:[%s198 + $0x8] sm:$0xf]
      %v213 = vld [vmem:[%s198 + $0xc] sm:$0xf]
      %v214 = vld [vmem:[%s198 + $0x10] sm:$0xf]
      %v215 = vld [vmem:[%s198 + $0x14] sm:$0xf]
      %v216 = vld [vmem:[%s198 + $0x18] sm:$0xf]
      %v217 = vld [vmem:[%s198 + $0x1c] sm:$0xf]
      %v218 = vld [vmem:[%s198 + $0x20] sm:$0xf]
      %v219 = vld [vmem:[%s198 + $0x24] sm:$0xf]
      %v220 = vld [vmem:[%s198 + $0x28] sm:$0xf]
      %v221 = vld [vmem:[%s198 + $0x2c] sm:$0xf]
      %v222 = vld [vmem:[%s198 + $0x30] sm:$0xf]
      %v223 = vld [vmem:[%s198 + $0x34] sm:$0xf]
      %v224 = vld [vmem:[%s198 + $0x38] sm:$0xf]
      %v225 = vld [vmem:[%s198 + $0x3c] sm:$0xf]
      %v226 = vld [vmem:[%s198 + $0x40] sm:$0xf]
      %v227 = vld [vmem:[%s198 + $0x44] sm:$0xf]
      %v228 = vld [vmem:[%s198 + $0x48] sm:$0xf]
      %v229 = vld [vmem:[%s198 + $0x4c] sm:$0xf]
      %v230 = vld [vmem:[%s198 + $0x50] sm:$0xf]
      %v231 = vld [vmem:[%s198 + $0x54] sm:$0xf]
      %v232 = vld [vmem:[%s198 + $0x58] sm:$0xf]
      %v233 = vld [vmem:[%s198 + $0x5c] sm:$0xf]
      %v234 = vld [vmem:[%s198 + $0x60] sm:$0xf]
      %v235 = vld [vmem:[%s198 + $0x64] sm:$0xf]
      %v236 = vld [vmem:[%s198 + $0x68] sm:$0xf]
      %v237 = vld [vmem:[%s198 + $0x6c] sm:$0xf]
      %v238 = vld [vmem:[%s198 + $0x70] sm:$0xf]
      %v239 = vld [vmem:[%s198 + $0x74] sm:$0xf]
      %v240 = vld [vmem:[%s198 + $0x78] sm:$0xf]
      %v241 = vld [vmem:[%s198 + $0x7c] sm:$0xf]
      %v242 = vld [vmem:[%s2] sm:$0xf]
      %v243 = vld [vmem:[%s2 + $0x4] sm:$0xf]
      %v244 = vld [vmem:[%s2 + $0x8] sm:$0xf]
      %v245 = vld [vmem:[%s2 + $0xc] sm:$0xf]
      %v246 = vld [vmem:[%s2 + $0x10] sm:$0xf]
      %v247 = vld [vmem:[%s2 + $0x14] sm:$0xf]
      %v248 = vld [vmem:[%s2 + $0x18] sm:$0xf]
      %v249 = vld [vmem:[%s2 + $0x1c] sm:$0xf]
      %v250 = vld [vmem:[%s2 + $0x20] sm:$0xf]
      %v251 = vld [vmem:[%s2 + $0x24] sm:$0xf]
      %v252 = vld [vmem:[%s2 + $0x28] sm:$0xf]
      %v253 = vld [vmem:[%s2 + $0x2c] sm:$0xf]
      %v254 = vld [vmem:[%s2 + $0x30] sm:$0xf]
      %v255 = vld [vmem:[%s2 + $0x34] sm:$0xf]
      %v256 = vld [vmem:[%s2 + $0x38] sm:$0xf]
      %v257 = vld [vmem:[%s2 + $0x3c] sm:$0xf]
      %v290 = vunpack.c.l.b16 %v210
      %v291 = vunpack.c.l.b16 %v211
      %v292 = vunpack.c.l.b16 %v212
      %v293 = vunpack.c.l.b16 %v213
      %v294 = vunpack.c.l.b16 %v214
      %v295 = vunpack.c.l.b16 %v215
      %v296 = vunpack.c.l.b16 %v216
      %v297 = vunpack.c.l.b16 %v217
      %v298 = vunpack.c.l.b16 %v218
      %v299 = vunpack.c.l.b16 %v219
      %v300 = vunpack.c.l.b16 %v220
      %v301 = vunpack.c.l.b16 %v221
      %v302 = vunpack.c.l.b16 %v222
      %v303 = vunpack.c.l.b16 %v223
      %v304 = vunpack.c.l.b16 %v224
      %v305 = vunpack.c.l.b16 %v225
      %v306 = vunpack.c.l.b16 %v226
      %v307 = vunpack.c.l.b16 %v227
      %v308 = vunpack.c.l.b16 %v228
      %v309 = vunpack.c.l.b16 %v229
      %v310 = vunpack.c.l.b16 %v230
      %v311 = vunpack.c.l.b16 %v231
      %v312 = vunpack.c.l.b16 %v232
      %v313 = vunpack.c.l.b16 %v233
      %v314 = vunpack.c.l.b16 %v234
      %v315 = vunpack.c.l.b16 %v235
      %v316 = vunpack.c.l.b16 %v236
      %v317 = vunpack.c.l.b16 %v237
      %v318 = vunpack.c.l.b16 %v238
      %v319 = vunpack.c.l.b16 %v239
      %v320 = vunpack.c.l.b16 %v240
      %v321 = vunpack.c.l.b16 %v241
      %v322 = vpack.c.b16 %v291, %v290
      %v323 = vpack.c.b16 %v293, %v292
      %v324 = vpack.c.b16 %v295, %v294
      %v325 = vpack.c.b16 %v297, %v296
      %v326 = vpack.c.b16 %v299, %v298
      %v327 = vpack.c.b16 %v301, %v300
      %v328 = vpack.c.b16 %v303, %v302
      %v329 = vpack.c.b16 %v305, %v304
      %v330 = vpack.c.b16 %v307, %v306
      %v331 = vpack.c.b16 %v309, %v308
      %v332 = vpack.c.b16 %v311, %v310
      %v333 = vpack.c.b16 %v313, %v312
      %v334 = vpack.c.b16 %v315, %v314
      %v335 = vpack.c.b16 %v317, %v316
      %v336 = vpack.c.b16 %v319, %v318
      %v337 = vpack.c.b16 %v321, %v320
      %v370 = vunpack.c.l.b16 %v242
      %v371 = vunpack.c.l.b16 %v243
      %v372 = vunpack.c.l.b16 %v244
      %v373 = vunpack.c.l.b16 %v245
      %v374 = vunpack.c.l.b16 %v246
      %v375 = vunpack.c.l.b16 %v247
      %v376 = vunpack.c.l.b16 %v248
      %v377 = vunpack.c.l.b16 %v249
      %v378 = vunpack.c.l.b16 %v250
      %v379 = vunpack.c.l.b16 %v251
      %v380 = vunpack.c.l.b16 %v252
      %v381 = vunpack.c.l.b16 %v253
      %v382 = vunpack.c.l.b16 %v254
      %v383 = vunpack.c.l.b16 %v255
      %v384 = vunpack.c.l.b16 %v256
      %v385 = vunpack.c.l.b16 %v257
      %v386 = vpack.c.b16 %v371, %v370
      %v387 = vpack.c.b16 %v373, %v372
      %v388 = vpack.c.b16 %v375, %v374
      %v389 = vpack.c.b16 %v377, %v376
      %v390 = vpack.c.b16 %v379, %v378
      %v391 = vpack.c.b16 %v381, %v380
      %v392 = vpack.c.b16 %v383, %v382
      %v393 = vpack.c.b16 %v385, %v384
      %402 = vmatpush.bf16.msra.mxu0 %v393
      %403 = vmatpush.bf16.msra.mxu0 %v392
      %404 = vmatpush.bf16.msra.mxu0 %v391
      %405 = vmatpush.bf16.msra.mxu0 %v390
      %406 = vmatpush.bf16.msra.mxu0 %v389
      %407 = vmatpush.bf16.msra.mxu0 %v388
      %408 = vmatpush.bf16.msra.mxu0 %v387
      %409 = vmatpush.bf16.msra.mxu0 %v386
      %410 = vmatmul.bf16.gmra.mxu0 %v322
      %v411 = vpop.f32.mrf.mxu0
      %v412 = vadd.f32 0.0, %v411
      %v413 = vpop.f32.mrf.mxu0
      %v414 = vadd.f32 0.0, %v413
      %415 = vmatmul.bf16.gmra.mxu0 %v323
      %v416 = vpop.f32.mrf.mxu0
      %v417 = vadd.f32 0.0, %v416
      %v418 = vpop.f32.mrf.mxu0
      %v419 = vadd.f32 0.0, %v418
      %420 = vmatmul.bf16.gmra.mxu0 %v324
      %v421 = vpop.f32.mrf.mxu0
      %v422 = vadd.f32 0.0, %v421
      %v423 = vpop.f32.mrf.mxu0
      %v424 = vadd.f32 0.0, %v423
      %425 = vmatmul.bf16.gmra.mxu0 %v325
      %v426 = vpop.f32.mrf.mxu0
      %v427 = vadd.f32 0.0, %v426
      %v428 = vpop.f32.mrf.mxu0
      %v429 = vadd.f32 0.0, %v428
      %430 = vmatmul.bf16.gmra.mxu0 %v326
      %v431 = vpop.f32.mrf.mxu0
      %v432 = vadd.f32 0.0, %v431
      %v433 = vpop.f32.mrf.mxu0
      %v434 = vadd.f32 0.0, %v433
      %435 = vmatmul.bf16.gmra.mxu0 %v327
      %v436 = vpop.f32.mrf.mxu0
      %v437 = vadd.f32 0.0, %v436
      %v438 = vpop.f32.mrf.mxu0
      %v439 = vadd.f32 0.0, %v438
      %440 = vmatmul.bf16.gmra.mxu0 %v328
      %v441 = vpop.f32.mrf.mxu0
      %v442 = vadd.f32 0.0, %v441
      %v443 = vpop.f32.mrf.mxu0
      %v444 = vadd.f32 0.0, %v443
      %445 = vmatmul.bf16.gmra.mxu0 %v329
      %v446 = vpop.f32.mrf.mxu0
      %v447 = vadd.f32 0.0, %v446
      %v448 = vpop.f32.mrf.mxu0
      %v449 = vadd.f32 0.0, %v448
      %450 = vmatmul.bf16.gmra.mxu0 %v330
      %v451 = vpop.f32.mrf.mxu0
      %v452 = vadd.f32 0.0, %v451
      %v453 = vpop.f32.mrf.mxu0
      %v454 = vadd.f32 0.0, %v453
      %455 = vmatmul.bf16.gmra.mxu0 %v331
      %v456 = vpop.f32.mrf.mxu0
      %v457 = vadd.f32 0.0, %v456
      %v458 = vpop.f32.mrf.mxu0
      %v459 = vadd.f32 0.0, %v458
      %460 = vmatmul.bf16.gmra.mxu0 %v332
      %v461 = vpop.f32.mrf.mxu0
      %v462 = vadd.f32 0.0, %v461
      %v463 = vpop.f32.mrf.mxu0
      %v464 = vadd.f32 0.0, %v463
      %465 = vmatmul.bf16.gmra.mxu0 %v333
      %v466 = vpop.f32.mrf.mxu0
      %v467 = vadd.f32 0.0, %v466
      %v468 = vpop.f32.mrf.mxu0
      %v469 = vadd.f32 0.0, %v468
      %470 = vmatmul.bf16.gmra.mxu0 %v334
      %v471 = vpop.f32.mrf.mxu0
      %v472 = vadd.f32 0.0, %v471
      %v473 = vpop.f32.mrf.mxu0
      %v474 = vadd.f32 0.0, %v473
      %475 = vmatmul.bf16.gmra.mxu0 %v335
      %v476 = vpop.f32.mrf.mxu0
      %v477 = vadd.f32 0.0, %v476
      %v478 = vpop.f32.mrf.mxu0
      %v479 = vadd.f32 0.0, %v478
      %480 = vmatmul.bf16.gmra.mxu0 %v336
      %v481 = vpop.f32.mrf.mxu0
      %v482 = vadd.f32 0.0, %v481
      %v483 = vpop.f32.mrf.mxu0
      %v484 = vadd.f32 0.0, %v483
      %485 = vmatmul.bf16.gmra.mxu0 %v337
      %v486 = vpop.f32.mrf.mxu0
      %v487 = vadd.f32 0.0, %v486
      %v488 = vpop.f32.mrf.mxu0
      %v489 = vadd.f32 0.0, %v488
      %490 = vdwg.mxu0
      %v491 = vld [vmem:[%s0] sm:$0x1]
      %v492 = vperm.slane %v491, 0
      %v493 = vmul.f32 %v412, %v492
      %v494 = vmul.f32 %v414, %v492
      %v495 = vmul.f32 %v417, %v492
      %v496 = vmul.f32 %v419, %v492
      %v497 = vmul.f32 %v422, %v492
      %v498 = vmul.f32 %v424, %v492
      %v499 = vmul.f32 %v427, %v492
      %v500 = vmul.f32 %v429, %v492
      %v501 = vmul.f32 %v432, %v492
      %v502 = vmul.f32 %v434, %v492
      %v503 = vmul.f32 %v437, %v492
      %v504 = vmul.f32 %v439, %v492
      %v505 = vmul.f32 %v442, %v492
      %v506 = vmul.f32 %v444, %v492
      %v507 = vmul.f32 %v447, %v492
      %v508 = vmul.f32 %v449, %v492
      %v509 = vmul.f32 %v452, %v492
      %v510 = vmul.f32 %v454, %v492
      %v511 = vmul.f32 %v457, %v492
      %v512 = vmul.f32 %v459, %v492
      %v513 = vmul.f32 %v462, %v492
      %v514 = vmul.f32 %v464, %v492
      %v515 = vmul.f32 %v467, %v492
      %v516 = vmul.f32 %v469, %v492
      %v517 = vmul.f32 %v472, %v492
      %v518 = vmul.f32 %v474, %v492
      %v519 = vmul.f32 %v477, %v492
      %v520 = vmul.f32 %v479, %v492
      %v521 = vmul.f32 %v482, %v492
      %v522 = vmul.f32 %v484, %v492
      %v523 = vmul.f32 %v487, %v492
      %v524 = vmul.f32 %v489, %v492
      %v525 = vld [vmem:[%s0 + $0x1] sm:$0x1]
      %v526 = vperm.slane %v525, 0
      %v527 = vadd.f32 %v493, %v526
      %v528 = vadd.f32 %v494, %v526
      %v529 = vadd.f32 %v495, %v526
      %v530 = vadd.f32 %v496, %v526
      %v531 = vadd.f32 %v497, %v526
      %v532 = vadd.f32 %v498, %v526
      %v533 = vadd.f32 %v499, %v526
      %v534 = vadd.f32 %v500, %v526
      %v535 = vadd.f32 %v501, %v526
      %v536 = vadd.f32 %v502, %v526
      %v537 = vadd.f32 %v503, %v526
      %v538 = vadd.f32 %v504, %v526
      %v539 = vadd.f32 %v505, %v526
      %v540 = vadd.f32 %v506, %v526
      %v541 = vadd.f32 %v507, %v526
      %v542 = vadd.f32 %v508, %v526
      %v543 = vadd.f32 %v509, %v526
      %v544 = vadd.f32 %v510, %v526
      %v545 = vadd.f32 %v511, %v526
      %v546 = vadd.f32 %v512, %v526
      %v547 = vadd.f32 %v513, %v526
      %v548 = vadd.f32 %v514, %v526
      %v549 = vadd.f32 %v515, %v526
      %v550 = vadd.f32 %v516, %v526
      %v551 = vadd.f32 %v517, %v526
      %v552 = vadd.f32 %v518, %v526
      %v553 = vadd.f32 %v519, %v526
      %v554 = vadd.f32 %v520, %v526
      %v555 = vadd.f32 %v521, %v526
      %v556 = vadd.f32 %v522, %v526
      %v557 = vadd.f32 %v523, %v526
      %v558 = vadd.f32 %v524, %v526
      %v559 = vmax.f32 %v527, 0.0
      %v560 = vmax.f32 %v528, 0.0
      %v561 = vmax.f32 %v529, 0.0
      %v562 = vmax.f32 %v530, 0.0
      %v563 = vmax.f32 %v531, 0.0
      %v564 = vmax.f32 %v532, 0.0
      %v565 = vmax.f32 %v533, 0.0
      %v566 = vmax.f32 %v534, 0.0
      %v567 = vmax.f32 %v535, 0.0
      %v568 = vmax.f32 %v536, 0.0
      %v569 = vmax.f32 %v537, 0.0
      %v570 = vmax.f32 %v538, 0.0
      %v571 = vmax.f32 %v539, 0.0
      %v572 = vmax.f32 %v540, 0.0
      %v573 = vmax.f32 %v541, 0.0
      %v574 = vmax.f32 %v542, 0.0
      %v575 = vmax.f32 %v543, 0.0
      %v576 = vmax.f32 %v544, 0.0
      %v577 = vmax.f32 %v545, 0.0
      %v578 = vmax.f32 %v546, 0.0
      %v579 = vmax.f32 %v547, 0.0
      %v580 = vmax.f32 %v548, 0.0
      %v581 = vmax.f32 %v549, 0.0
      %v582 = vmax.f32 %v550, 0.0
      %v583 = vmax.f32 %v551, 0.0
      %v584 = vmax.f32 %v552, 0.0
      %v585 = vmax.f32 %v553, 0.0
      %v586 = vmax.f32 %v554, 0.0
      %v587 = vmax.f32 %v555, 0.0
      %v588 = vmax.f32 %v556, 0.0
      %v589 = vmax.f32 %v557, 0.0
      %v590 = vmax.f32 %v558, 0.0
      %591 = vst [vmem:[%s208] sm:$0xff] %v559
      %592 = vst [vmem:[%s208 + $0x8] sm:$0xff] %v560
      %593 = vst [vmem:[%s208 + $0x10] sm:$0xff] %v561
      %594 = vst [vmem:[%s208 + $0x18] sm:$0xff] %v562
      %595 = vst [vmem:[%s208 + $0x20] sm:$0xff] %v563
      %596 = vst [vmem:[%s208 + $0x28] sm:$0xff] %v564
      %597 = vst [vmem:[%s208 + $0x30] sm:$0xff] %v565
      %598 = vst [vmem:[%s208 + $0x38] sm:$0xff] %v566
      %599 = vst [vmem:[%s208 + $0x40] sm:$0xff] %v567
      %600 = vst [vmem:[%s208 + $0x48] sm:$0xff] %v568
      %601 = vst [vmem:[%s208 + $0x50] sm:$0xff] %v569
      %602 = vst [vmem:[%s208 + $0x58] sm:$0xff] %v570
      %603 = vst [vmem:[%s208 + $0x60] sm:$0xff] %v571
      %604 = vst [vmem:[%s208 + $0x68] sm:$0xff] %v572
      %605 = vst [vmem:[%s208 + $0x70] sm:$0xff] %v573
      %606 = vst [vmem:[%s208 + $0x78] sm:$0xff] %v574
      %607 = vst [vmem:[%s208 + $0x80] sm:$0xff] %v575
      %608 = vst [vmem:[%s208 + $0x88] sm:$0xff] %v576
      %609 = vst [vmem:[%s208 + $0x90] sm:$0xff] %v577
      %610 = vst [vmem:[%s208 + $0x98] sm:$0xff] %v578
      %611 = vst [vmem:[%s208 + $0xa0] sm:$0xff] %v579
      %612 = vst [vmem:[%s208 + $0xa8] sm:$0xff] %v580
      %613 = vst [vmem:[%s208 + $0xb0] sm:$0xff] %v581
      %614 = vst [vmem:[%s208 + $0xb8] sm:$0xff] %v582
      %615 = vst [vmem:[%s208 + $0xc0] sm:$0xff] %v583
      %616 = vst [vmem:[%s208 + $0xc8] sm:$0xff] %v584
      %617 = vst [vmem:[%s208 + $0xd0] sm:$0xff] %v585
      %618 = vst [vmem:[%s208 + $0xd8] sm:$0xff] %v586
      %619 = vst [vmem:[%s208 + $0xe0] sm:$0xff] %v587
      %620 = vst [vmem:[%s208 + $0xe8] sm:$0xff] %v588
      %621 = vst [vmem:[%s208 + $0xf0] sm:$0xff] %v589
      %622 = vst [vmem:[%s208 + $0xf8] sm:$0xff] %v590
      %s623 = smul.u32 32, %s19
      %p624 = scmp.lt.s32.totalorder %s18, 1
      %s625 = scalar_select %p624, %s18, 1
      %p626 = scmp.lt.s32.totalorder %s623, 31
      %s627 = scalar_select %p626, %s623, 31
      %s628 = smul.addr %s625, 32
      %s629 = sadd.s32 %s627, %s628
      %s630 = smul.addr %s629, 8
      %s631 = scalar_lea.vmem %s3, %s630
      // Predicated region
      $region33: #{block_forward.3} parent=31 // pred_check
        %p632 = pneg %p116
      $region34: #{block_forward.3} parent=31 // pred_check_branch
        %634 = sbr.rel (%p632) target = $region36
      $region35: #{block_forward.3} parent=31 // pred_region
        %s635 = smul.u32 32, %s19
      $region36: #{block_forward.3} parent=31 // pred_fallthru
        _
    $region32: #{block_forward.3} parent=5 // pred_fallthru
      _
    %p636 = scmp.le.s32.totalorder 2, %s9
    // Predicated region
    $region37: #{block_forward.3} parent=5 // pred_check
      %p637 = pneg %p636
    $region38: #{block_forward.3} parent=5 // pred_check_branch
      %639 = sbr.rel (%p637) target = $region40
    $region39: #{block_forward.3} parent=5 // pred_region
      %s640 = ssub.s32 %s9, 2
      // Predicated region
      $region41: #{block_forward.3} parent=39 // pred_check
        %p641 = pneg %p122
      $region42: #{block_forward.3} parent=39 // pred_check_branch
        %643 = sbr.rel (%p641) target = $region44
      $region43: #{block_forward.3} parent=39 // pred_region
        %s644 = smul.u32 32, %s21
        %p645 = scmp.lt.s32.totalorder %s20, 1
        %s646 = scalar_select %p645, %s20, 1
        %p647 = scmp.lt.s32.totalorder %s644, 31
        %s648 = scalar_select %p647, %s644, 31
        %s649 = smul.addr %s646, 32
        %s650 = sadd.s32 %s648, %s649
        %s651 = smul.addr %s650, 8
        %s652 = scalar_lea.vmem %s3, %s651
      $region44: #{block_forward.3} parent=39 // pred_fallthru
        _
    $region40: #{block_forward.3} parent=5 // pred_fallthru
      _
  $region6: #{block_forward.3} parent=0 // loop_footer
    %s13 = sadd.s32 1, %s9
  $region7: #{block_forward.3} parent=0 // loop_footer_branch
    %8 = sbr.rel target = $region3
  $region8: #{block_forward.3} parent=0 // loop_exit
    _

</llo_original>
